<compile_context>
chip_gen: v7x
topology: tpu7x:2x2x1
jax: 0.10.0
libtpu: 0.0.40
codegen_flags: <defaults>
</compile_context>

<pallas_src>
import functools

import jax
import jax.numpy as jnp
from jax.experimental import pallas as pl
from jax.experimental.pallas import tpu as pltpu

INPUT_DIM = 10   # n_discrete_features
HIDDEN_DIM = 64
OUTPUT_DIM = 2   # n_classes


def _round_up(x, m):
    return (x + m - 1) // m * m


def _two_layer_kernel(xt_ref, w1_ref, b1_ref, w2_ref, b2_ref, out_ref, *,
                      chunk, n_chunks):
    # Weights / biases are VMEM-resident across the whole batch grid (constant
    # index_map); load them once per tile, outside the lane-chunk loop.
    w1 = w1_ref[...]                                            # [HID, IN]  bf16
    w2 = w2_ref[...]                                            # [OUT, HID] bf16
    # Hoisted lane-broadcasts of the biases (not CSE'd if left inside the loop).
    b1 = jnp.broadcast_to(b1_ref[...], (HIDDEN_DIM, chunk))     # [HID, chunk] f32
    b2 = jnp.broadcast_to(b2_ref[...], (OUTPUT_DIM, chunk))     # [OUT, chunk] f32

    def body(c, carry):
        c0 = pl.multiple_of(c * chunk, chunk)
        xc = xt_ref[:, pl.ds(c0, chunk)]                        # bf16 [IN, chunk]
        # fc1 (MXU, f32 accumulate) + bias + ReLU in f32.
        h = jnp.dot(w1, xc, preferred_element_type=jnp.float32)  # [HID, chunk]
        h = jnp.maximum(h + b1, 0.0).astype(jnp.bfloat16)        # bf16 only for MXU
        # fc2 (MXU, f32 accumulate) + bias.
        y = jnp.dot(w2, h, preferred_element_type=jnp.float32) + b2  # [OUT, chunk]
        out_ref[:, pl.ds(c0, chunk)] = y.astype(out_ref.dtype)
        return carry

    # Unrolled loop bounds the live range of the [HID, chunk] f32 activation.
    jax.lax.fori_loop(0, n_chunks, body, 0, unroll=True)


def two_layer_nn(x, w1, b1, w2, b2, *, block_b=4096):
    """x: [B, INPUT_DIM]; w1: [HID, IN]; b1: [HID]; w2: [OUT, HID]; b2: [OUT].

    Returns relu(x @ w1.T + b1) @ w2.T + b2 as [B, OUTPUT_DIM] in x.dtype
    (PyTorch nn.Linear weight layout).
    """
    assert block_b % 128 == 0
    B = x.shape[0]
    out_dtype = x.dtype

    # Batch tile along the LANE axis.  Must be a multiple of 128 lanes (or the
    # full batch).  Keep >= 2 grid steps when possible for v7x's 2 TensorCores.
    if B <= 256:
        TB = B                                        # single full-extent tile
    else:
        TB = min(block_b, _round_up(pl.cdiv(B, 2), 128))
    grid = (pl.cdiv(B, TB),)

    # Lane-chunk size inside the kernel (keeps the [HID, chunk] f32 activation
    # comfortably within the register file).
    if TB % 512 == 0:
        chunk = 512
    elif TB % 256 == 0:
        chunk = 256
    elif TB % 128 == 0:
        chunk = 128
    else:
        chunk = TB
    n_chunks = TB // chunk

    # Single layout-plumbing pass: transpose to [IN, B] (batch on lanes) fused
    # with the bf16 downcast for the MXU / HBM-read traffic.
    xt_bf = x.T.astype(jnp.bfloat16)                  # [IN, B]
    w1_bf = w1.astype(jnp.bfloat16)                   # [HID, IN]
    w2_bf = w2.astype(jnp.bfloat16)                   # [OUT, HID]
    b1_c = b1.reshape(-1, 1).astype(jnp.float32)      # [HID, 1]
    b2_c = b2.reshape(-1, 1).astype(jnp.float32)      # [OUT, 1]

    flops = 2 * B * (INPUT_DIM * HIDDEN_DIM + HIDDEN_DIM * OUTPUT_DIM)
    bytes_accessed = (
        B * INPUT_DIM * 2                             # x^T (bf16)
        + HIDDEN_DIM * INPUT_DIM * 2                  # w1 (bf16)
        + OUTPUT_DIM * HIDDEN_DIM * 2                 # w2 (bf16)
        + (HIDDEN_DIM + OUTPUT_DIM) * 4               # biases (f32)
        + B * OUTPUT_DIM * jnp.dtype(out_dtype).itemsize)

    kernel = functools.partial(_two_layer_kernel, chunk=chunk, n_chunks=n_chunks)

    out_t = pl.pallas_call(
        kernel,
        out_shape=jax.ShapeDtypeStruct((OUTPUT_DIM, B), out_dtype),
        grid_spec=pltpu.PrefetchScalarGridSpec(
            num_scalar_prefetch=0,
            grid=grid,
            in_specs=[
                pl.BlockSpec((INPUT_DIM, TB), lambda i: (0, i)),            # x^T tile
                pl.BlockSpec((HIDDEN_DIM, INPUT_DIM), lambda i: (0, 0)),    # w1 resident
                pl.BlockSpec((HIDDEN_DIM, 1), lambda i: (0, 0)),            # b1 resident
                pl.BlockSpec((OUTPUT_DIM, HIDDEN_DIM), lambda i: (0, 0)),   # w2 resident
                pl.BlockSpec((OUTPUT_DIM, 1), lambda i: (0, 0)),            # b2 resident
            ],
            out_specs=pl.BlockSpec((OUTPUT_DIM, TB), lambda i: (0, i)),     # y^T tile
        ),
        compiler_params=pltpu.CompilerParams(
            dimension_semantics=("parallel",)),
        cost_estimate=pl.CostEstimate(
            flops=flops, transcendentals=0, bytes_accessed=bytes_accessed),
    )(xt_bf, w1_bf, b1_c, w2_bf, b2_c)

    # Back to the PyTorch [B, OUT] layout (tiny: OUTPUT_DIM * B elements).
    return out_t.T


def init_params(key):
    """Deterministic init mimicking nn.Linear's uniform(-1/sqrt(fan_in), ...).

    Weights are in the PyTorch layout: w1 [HID, IN], w2 [OUT, HID].
    """
    k1, k2, k3, k4 = jax.random.split(key, 4)
    bound1 = 1.0 / jnp.sqrt(INPUT_DIM)
    bound2 = 1.0 / jnp.sqrt(HIDDEN_DIM)
    w1 = jax.random.uniform(k1, (HIDDEN_DIM, INPUT_DIM), jnp.float32, -bound1, bound1)
    b1 = jax.random.uniform(k2, (HIDDEN_DIM,), jnp.float32, -bound1, bound1)
    w2 = jax.random.uniform(k3, (OUTPUT_DIM, HIDDEN_DIM), jnp.float32, -bound2, bound2)
    b2 = jax.random.uniform(k4, (OUTPUT_DIM,), jnp.float32, -bound2, bound2)
    return w1, b1, w2, b2


if __name__ == "__main__":
    key = jax.random.PRNGKey(0)
    kx, kp = jax.random.split(key)
    # Non-multiple of the lane tile -> exercises the 2-step grid + ragged tile.
    batch = 1000
    x = jax.random.normal(kx, (batch, INPUT_DIM), jnp.float32)
    w1, b1, w2, b2 = init_params(kp)

    out = jax.block_until_ready(two_layer_nn(x, w1, b1, w2, b2))
    assert out.shape == (batch, OUTPUT_DIM)

    # Reference with matching dtype handling (bf16 MXU inputs, f32 accumulation).
    h = jnp.dot(x.astype(jnp.bfloat16), w1.T.astype(jnp.bfloat16),
                preferred_element_type=jnp.float32) + b1
    h = jnp.maximum(h, 0.0).astype(jnp.bfloat16)
    ref = jnp.dot(h, w2.T.astype(jnp.bfloat16),
                  preferred_element_type=jnp.float32) + b2
    assert jnp.allclose(out, ref, atol=1e-3, rtol=1e-3), float(
        jnp.max(jnp.abs(out - ref)))

    # Coarser sanity check against the full-f32 PyTorch-equivalent forward.
    ref_f32 = jnp.maximum(x @ w1.T + b1, 0.0) @ w2.T + b2
    assert jnp.allclose(out, ref_f32, atol=1e-1, rtol=1e-1)

    print("KERNEL_OK")
</pallas_src>

<mosaic_0001>
module attributes {stable_mosaic.version = 11 : i64} {
  func.func @_two_layer_kernel(%arg0: i32, %arg1: memref<10x512xbf16, #tpu.memory_space<vmem>>, %arg2: memref<64x10xbf16, #tpu.memory_space<vmem>>, %arg3: memref<64x1xf32, #tpu.memory_space<vmem>>, %arg4: memref<2x64xbf16, #tpu.memory_space<vmem>>, %arg5: memref<2x1xf32, #tpu.memory_space<vmem>>, %arg6: memref<2x512xf32, #tpu.memory_space<vmem>>) attributes {dimension_semantics = [#tpu.dimension_semantics<parallel>], iteration_bounds = array<i64: 2>, scalar_prefetch = 0 : i64, scratch_operands = 0 : i64, tpu.core_type = #tpu.core_type<tc>, window_params = [{transform_indices = @transform_0, window_bounds = array<i64: 10, 512>}, {pipeline_mode = #tpu.pipeline_mode<synchronous>, transform_indices = @transform_1, window_bounds = array<i64: 64, 10>}, {pipeline_mode = #tpu.pipeline_mode<synchronous>, transform_indices = @transform_2, window_bounds = array<i64: 64, 1>}, {pipeline_mode = #tpu.pipeline_mode<synchronous>, transform_indices = @transform_3, window_bounds = array<i64: 2, 64>}, {pipeline_mode = #tpu.pipeline_mode<synchronous>, transform_indices = @transform_4, window_bounds = array<i64: 2, 1>}, {transform_indices = @transform_5, window_bounds = array<i64: 2, 512>}]} {
    %c0 = arith.constant 0 : index
    %c0_0 = arith.constant 0 : index
    %0 = vector.load %arg2[%c0, %c0_0] : memref<64x10xbf16, #tpu.memory_space<vmem>>, vector<64x10xbf16>
    %c0_1 = arith.constant 0 : index
    %c0_2 = arith.constant 0 : index
    %1 = vector.load %arg4[%c0_1, %c0_2] : memref<2x64xbf16, #tpu.memory_space<vmem>>, vector<2x64xbf16>
    %c0_3 = arith.constant 0 : index
    %c0_4 = arith.constant 0 : index
    %2 = vector.load %arg3[%c0_3, %c0_4] : memref<64x1xf32, #tpu.memory_space<vmem>>, vector<64x1xf32>
    %3 = vector.shape_cast %2 : vector<64x1xf32> to vector<64x1xf32>
    %4 = vector.broadcast %3 : vector<64x1xf32> to vector<64x512xf32>
    %c0_5 = arith.constant 0 : index
    %c0_6 = arith.constant 0 : index
    %5 = vector.load %arg5[%c0_5, %c0_6] : memref<2x1xf32, #tpu.memory_space<vmem>>, vector<2x1xf32>
    %6 = vector.shape_cast %5 : vector<2x1xf32> to vector<2x1xf32>
    %7 = vector.broadcast %6 : vector<2x1xf32> to vector<2x512xf32>
    %c0_i32 = arith.constant 0 : i32
    %c512_i32 = arith.constant 512 : i32
    %8 = arith.muli %c0_i32, %c512_i32 : i32
    %9 = tpu.assume_multiple %8, 512 : i32
    %c0_7 = arith.constant 0 : index
    %10 = arith.index_cast %9 : i32 to index
    %11 = vector.load %arg1[%c0_7, %10] : memref<10x512xbf16, #tpu.memory_space<vmem>>, vector<10x512xbf16>
    %cst = arith.constant dense<0.000000e+00> : vector<64x512xf32>
    %12 = tpu.matmul %0, %11, %cst {dimension_numbers = #tpu.dot_dimension_numbers<[1], [0], [0], [1], [0, 0, 1, 1], [], []>} : vector<64x10xbf16>, vector<10x512xbf16>, vector<64x512xf32> -> vector<64x512xf32>
    %13 = arith.addf %12, %4 : vector<64x512xf32>
    %cst_8 = arith.constant 0.000000e+00 : f32
    %14 = vector.broadcast %cst_8 : f32 to vector<64x512xf32>
    %15 = arith.maximumf %13, %14 : vector<64x512xf32>
    %16 = arith.truncf %15 : vector<64x512xf32> to vector<64x512xbf16>
    %cst_9 = arith.constant dense<0.000000e+00> : vector<2x512xf32>
    %17 = tpu.matmul %1, %16, %cst_9 {dimension_numbers = #tpu.dot_dimension_numbers<[1], [0], [0], [1], [0, 0, 1, 1], [], []>} : vector<2x64xbf16>, vector<64x512xbf16>, vector<2x512xf32> -> vector<2x512xf32>
    %18 = arith.addf %17, %7 : vector<2x512xf32>
    %c0_10 = arith.constant 0 : index
    %19 = arith.index_cast %9 : i32 to index
    %20 = vector.load %arg6[%c0_10, %19] : memref<2x512xf32, #tpu.memory_space<vmem>>, vector<2x512xf32>
    tpu.vector_store %arg6[%c0_10, %19], %18 {strides = array<i32>} : memref<2x512xf32, #tpu.memory_space<vmem>>, vector<2x512xf32>,
    %c1_i32 = arith.constant 1 : i32
    return
  }
  func.func @transform_0(%arg0: i32) -> (i32, i32) {
    %c0_i32 = arith.constant 0 : i32
    %c0_i32_0 = arith.constant 0 : i32
    return %c0_i32, %arg0 : i32, i32
  }
  func.func @transform_1(%arg0: i32) -> (i32, i32) {
    %c0_i32 = arith.constant 0 : i32
    %c0_i32_0 = arith.constant 0 : i32
    %c0_i32_1 = arith.constant 0 : i32
    return %c0_i32, %c0_i32_0 : i32, i32
  }
  func.func @transform_2(%arg0: i32) -> (i32, i32) {
    %c0_i32 = arith.constant 0 : i32
    %c0_i32_0 = arith.constant 0 : i32
    %c0_i32_1 = arith.constant 0 : i32
    return %c0_i32, %c0_i32_0 : i32, i32
  }
  func.func @transform_3(%arg0: i32) -> (i32, i32) {
    %c0_i32 = arith.constant 0 : i32
    %c0_i32_0 = arith.constant 0 : i32
    %c0_i32_1 = arith.constant 0 : i32
    return %c0_i32, %c0_i32_0 : i32, i32
  }
  func.func @transform_4(%arg0: i32) -> (i32, i32) {
    %c0_i32 = arith.constant 0 : i32
    %c0_i32_0 = arith.constant 0 : i32
    %c0_i32_1 = arith.constant 0 : i32
    return %c0_i32, %c0_i32_0 : i32, i32
  }
  func.func @transform_5(%arg0: i32) -> (i32, i32) {
    %c0_i32 = arith.constant 0 : i32
    %c0_i32_0 = arith.constant 0 : i32
    return %c0_i32, %arg0 : i32, i32
  }
}

</mosaic_0001>

<llo_original>
// kernel: tpu_custom_call.1
$region0: #{tpu_custom_call.1}
  #allocation0 [shape = 'u32[]', space=smem, size = 0x4, offset = 0x4, fixed_abs, tag = 'smem constant byte address 0x4 - core index']
  #allocation1 [shape = 'u32[144,128]{1,0:T(1,128)}', space=vmem, size = 0x12000, scoped, tag = 'internal scratch']
  %s0 = inlined_call_operand.vmem [shape: bf16[10,1000], index: 0, kind: input, shape index: {}]
  %s1 = inlined_call_operand.vmem [shape: bf16[64,10], index: 1, kind: input, shape index: {}]
  %s2 = inlined_call_operand.vmem [shape: f32[64,1], index: 2, kind: input, shape index: {}]
  %s3 = inlined_call_operand.vmem [shape: bf16[2,64], index: 3, kind: input, shape index: {}]
  %s4 = inlined_call_operand.vmem [shape: f32[2,1], index: 4, kind: input, shape index: {}]
  %s5 = inlined_call_operand.hbm [shape: f32[2,1000], index: 5, kind: output, shape index: {}]
  %s6 = sld [smem:[#allocation0]]
  $region76: #{tpu_custom_call.1} parent=0
    _
  %s8 = ssub.s32 1, %s6
  %s9 = scalar_select 0, %s8, %s6
  $region1: #{tpu_custom_call.1} parent=0
    #allocation2 [shape = 'u8[32768]{0}', space=vmem, size = 0x8000, scoped, tag = 'input window, operand 0']
    #allocation3 [shape = 'u8[8192]{0}', space=vmem, size = 0x2000, scoped, tag = 'output window, operand 0']
    #allocation4 [shape = 's32[2]{0}', space=sflag, size = 0x8, scoped, tag = 'scoped memory for tpu_custom_call.1']
    %10 = vsyncpa [#allocation4], 0
    %s11 = scalar_lea.sflag [#allocation4], 1
    %12 = vsyncpa %s11, 0
    loop: start=0, step=1, limit=4
    $region2: #{tpu_custom_call.1} parent=1 // loop_pre_header
      _
    $region3: #{tpu_custom_call.1} parent=1 // loop_header
      %s14 = sphi 0, %s18
      %p15 = scmp.ge.s32.totalorder %s14, 4
      %s24 = sphi 0, %s26
      %s27 = sphi 0, %s24
      %s28 = sphi 0, %s27
      %s44 = sphi 0, %s28
      %s48 = sphi 0, %s48
      %s50 = sphi 0, %s48
      %s51 = sphi 0, %s50
      %s65 = sphi 0, %s51
      %s69 = sphi 0, %s69
      %s71 = sphi 0, %s69
      %s72 = sphi 0, %s71
      %s86 = sphi 0, %s72
      %s90 = sphi 0, %s90
      %s92 = sphi 0, %s90
      %s93 = sphi 0, %s92
      %s107 = sphi 0, %s93
      %s111 = sphi 0, %s111
      %s113 = sphi 0, %s111
      %s114 = sphi 0, %s113
      %s128 = sphi 0, %s114
      %s134 = sphi 0, %s136
      %s137 = sphi 0, %s134
      %s138 = sphi 0, %s137
      %s154 = sphi 0, %s138
    $region4: #{tpu_custom_call.1} parent=1 // loop_header_branch
      %17 = sbr.rel (%p15) target = $region8
    $region5: #{tpu_custom_call.1} parent=1 // loop_body
      %s19 = ssub.s32 %s14, 1
      %s20 = ssub.s32 %s14, 2
      %s21 = sadd.s32 %s14, 1
      %s22 = ssub.s32 %s14, %s21
      %p23 = scmp.eq.s32.totalorder %s22, 0
      %s25 = sadd.s32 %s24, 1
      %s26 = scalar_select %p23, %s24, %s25
      %p29 = pneg %p23
      %p30 = scmp.eq.s32.totalorder %s14, 1
      %p31 = por %p29, %p30
      %p32 = scmp.ne.s32.totalorder %s24, %s27
      %p33 = scmp.eq.s32.totalorder %s14, 0
      %p34 = por %p32, %p33
      %p35 = scmp.ne.s32.totalorder %s24, %s27
      %p36 = scmp.eq.s32.totalorder %s19, 1
      %p37 = por %p35, %p36
      %p38 = scmp.ne.s32.totalorder %s27, %s28
      %p39 = scmp.eq.s32.totalorder %s19, 0
      %p40 = por %p38, %p39
      %p41 = scmp.ne.s32.totalorder %s27, %s28
      %p42 = scmp.eq.s32.totalorder %s20, 1
      %p43 = por %p41, %p42
      %p45 = scmp.ne.s32.totalorder %s28, %s44
      %p46 = scmp.eq.s32.totalorder %s20, 0
      %p47 = por %p45, %p46
      %s49 = sadd.s32 %s48, 1
      %p52 = scmp.eq.s32.totalorder %s14, 1
      %p53 = scmp.ne.s32.totalorder %s48, %s50
      %p54 = scmp.eq.s32.totalorder %s14, 0
      %p55 = por %p53, %p54
      %p56 = scmp.ne.s32.totalorder %s48, %s50
      %p57 = scmp.eq.s32.totalorder %s19, 1
      %p58 = por %p56, %p57
      %p59 = scmp.ne.s32.totalorder %s50, %s51
      %p60 = scmp.eq.s32.totalorder %s19, 0
      %p61 = por %p59, %p60
      %p62 = scmp.ne.s32.totalorder %s50, %s51
      %p63 = scmp.eq.s32.totalorder %s20, 1
      %p64 = por %p62, %p63
      %p66 = scmp.ne.s32.totalorder %s51, %s65
      %p67 = scmp.eq.s32.totalorder %s20, 0
      %p68 = por %p66, %p67
      %s70 = sadd.s32 %s69, 1
      %p73 = scmp.eq.s32.totalorder %s14, 1
      %p74 = scmp.ne.s32.totalorder %s69, %s71
      %p75 = scmp.eq.s32.totalorder %s14, 0
      %p76 = por %p74, %p75
      %p77 = scmp.ne.s32.totalorder %s69, %s71
      %p78 = scmp.eq.s32.totalorder %s19, 1
      %p79 = por %p77, %p78
      %p80 = scmp.ne.s32.totalorder %s71, %s72
      %p81 = scmp.eq.s32.totalorder %s19, 0
      %p82 = por %p80, %p81
      %p83 = scmp.ne.s32.totalorder %s71, %s72
      %p84 = scmp.eq.s32.totalorder %s20, 1
      %p85 = por %p83, %p84
      %p87 = scmp.ne.s32.totalorder %s72, %s86
      %p88 = scmp.eq.s32.totalorder %s20, 0
      %p89 = por %p87, %p88
      %s91 = sadd.s32 %s90, 1
      %p94 = scmp.eq.s32.totalorder %s14, 1
      %p95 = scmp.ne.s32.totalorder %s90, %s92
      %p96 = scmp.eq.s32.totalorder %s14, 0
      %p97 = por %p95, %p96
      %p98 = scmp.ne.s32.totalorder %s90, %s92
      %p99 = scmp.eq.s32.totalorder %s19, 1
      %p100 = por %p98, %p99
      %p101 = scmp.ne.s32.totalorder %s92, %s93
      %p102 = scmp.eq.s32.totalorder %s19, 0
      %p103 = por %p101, %p102
      %p104 = scmp.ne.s32.totalorder %s92, %s93
      %p105 = scmp.eq.s32.totalorder %s20, 1
      %p106 = por %p104, %p105
      %p108 = scmp.ne.s32.totalorder %s93, %s107
      %p109 = scmp.eq.s32.totalorder %s20, 0
      %p110 = por %p108, %p109
      %s112 = sadd.s32 %s111, 1
      %p115 = scmp.eq.s32.totalorder %s14, 1
      %p116 = scmp.ne.s32.totalorder %s111, %s113
      %p117 = scmp.eq.s32.totalorder %s14, 0
      %p118 = por %p116, %p117
      %p119 = scmp.ne.s32.totalorder %s111, %s113
      %p120 = scmp.eq.s32.totalorder %s19, 1
      %p121 = por %p119, %p120
      %p122 = scmp.ne.s32.totalorder %s113, %s114
      %p123 = scmp.eq.s32.totalorder %s19, 0
      %p124 = por %p122, %p123
      %p125 = scmp.ne.s32.totalorder %s113, %s114
      %p126 = scmp.eq.s32.totalorder %s20, 1
      %p127 = por %p125, %p126
      %p129 = scmp.ne.s32.totalorder %s114, %s128
      %p130 = scmp.eq.s32.totalorder %s20, 0
      %p131 = por %p129, %p130
      %s132 = ssub.s32 %s14, %s21
      %p133 = scmp.eq.s32.totalorder %s132, 0
      %s135 = sadd.s32 %s134, 1
      %s136 = scalar_select %p133, %s134, %s135
      %p139 = pneg %p133
      %p140 = scmp.eq.s32.totalorder %s14, 1
      %p141 = por %p139, %p140
      %p142 = scmp.ne.s32.totalorder %s134, %s137
      %p143 = scmp.eq.s32.totalorder %s14, 0
      %p144 = por %p142, %p143
      %p145 = scmp.ne.s32.totalorder %s134, %s137
      %p146 = scmp.eq.s32.totalorder %s19, 1
      %p147 = por %p145, %p146
      %p148 = scmp.ne.s32.totalorder %s137, %s138
      %p149 = scmp.eq.s32.totalorder %s19, 0
      %p150 = por %p148, %p149
      %p151 = scmp.ne.s32.totalorder %s137, %s138
      %p152 = scmp.eq.s32.totalorder %s20, 1
      %p153 = por %p151, %p152
      %p155 = scmp.ne.s32.totalorder %s138, %s154
      %p156 = scmp.eq.s32.totalorder %s20, 0
      %p157 = por %p155, %p156
      %p158 = scmp.le.s32.totalorder 1, %s14
      %p159 = scmp.lt.s32.totalorder %s14, 3
      %p160 = pnand %p158, %p159
      %p161 = pneg %p160
      // Predicated region
      $region9: #{tpu_custom_call.1} parent=5 // pred_check
        _
      $region10: #{tpu_custom_call.1} parent=5 // pred_check_branch
        %163 = sbr.rel (%p160) target = $region12
      $region11: #{tpu_custom_call.1} parent=5 // pred_region
        %s164 = ssub.s32 %s14, 1
        // Predicated region
        $region13: #{tpu_custom_call.1} parent=11 // pred_check
          %p165 = pneg %p61
        $region14: #{tpu_custom_call.1} parent=11 // pred_check_branch
          %167 = sbr.rel (%p165) target = $region16
        $region15: #{tpu_custom_call.1} parent=11 // pred_region
          _
        $region16: #{tpu_custom_call.1} parent=11 // pred_fallthru
          _
        // Predicated region
        $region17: #{tpu_custom_call.1} parent=11 // pred_check
          %p168 = pneg %p82
        $region18: #{tpu_custom_call.1} parent=11 // pred_check_branch
          %170 = sbr.rel (%p168) target = $region20
        $region19: #{tpu_custom_call.1} parent=11 // pred_region
          _
        $region20: #{tpu_custom_call.1} parent=11 // pred_fallthru
          _
        // Predicated region
        $region21: #{tpu_custom_call.1} parent=11 // pred_check
          %p171 = pneg %p103
        $region22: #{tpu_custom_call.1} parent=11 // pred_check_branch
          %173 = sbr.rel (%p171) target = $region24
        $region23: #{tpu_custom_call.1} parent=11 // pred_region
          _
        $region24: #{tpu_custom_call.1} parent=11 // pred_fallthru
          _
        // Predicated region
        $region25: #{tpu_custom_call.1} parent=11 // pred_check
          %p174 = pneg %p124
        $region26: #{tpu_custom_call.1} parent=11 // pred_check_branch
          %176 = sbr.rel (%p174) target = $region28
        $region27: #{tpu_custom_call.1} parent=11 // pred_region
          _
        $region28: #{tpu_custom_call.1} parent=11 // pred_fallthru
          _
      $region12: #{tpu_custom_call.1} parent=5 // pred_fallthru
        _
      %p177 = scmp.lt.s32.totalorder %s14, 2
      // Predicated region
      $region29: #{tpu_custom_call.1} parent=5 // pred_check
        %p178 = pneg %p177
      $region30: #{tpu_custom_call.1} parent=5 // pred_check_branch
        %180 = sbr.rel (%p178) target = $region32
      $region31: #{tpu_custom_call.1} parent=5 // pred_region
        // Predicated region
        $region33: #{tpu_custom_call.1} parent=31 // pred_check
          %p181 = pneg %p34
        $region34: #{tpu_custom_call.1} parent=31 // pred_check_branch
          %183 = sbr.rel (%p181) target = $region36
        $region35: #{tpu_custom_call.1} parent=31 // pred_region
          %s184 = sand.u32 %s24, 1
          %s185 = sand.u32 %s24, 1
          %s186 = smul.addr %s185, 32
          %s187 = scalar_lea.vmem [#allocation2], %s186
          %s188 = smul.u32 4, %s14
          %s189 = smul.addr %s188, 4
          %s190 = scalar_lea.vmem %s0, %s189
          // Predicated region
          $region37: #{tpu_custom_call.1} parent=35 // pred_check
            _
          $region38: #{tpu_custom_call.1} parent=35 // pred_check_branch
            %192 = sbr.rel (0) target = $region40
          $region39: #{tpu_custom_call.1} parent=35 // pred_region
            // Predicated region
            $region41: #{tpu_custom_call.1} parent=39 // pred_check
              _
            $region42: #{tpu_custom_call.1} parent=39 // pred_check_branch
              %194 = sbr.rel (0) target = $region44
            $region43: #{tpu_custom_call.1} parent=39 // pred_region
              loop: start=0, step=1, limit=1
              $region45: #{tpu_custom_call.1} parent=43 // loop_pre_header
                _
              $region46: #{tpu_custom_call.1} parent=43 // loop_header
                %s196 = sphi 0, %s200
                %p197 = scmp.ge.s32.totalorder %s196, 1
                %s201 = sphi %s190, %s190
                %s202 = sphi %s187, %s187
              $region47: #{tpu_custom_call.1} parent=43 // loop_header_branch
                %199 = sbr.rel (%p197) target = $region51
              $region48: #{tpu_custom_call.1} parent=43 // loop_body
                %v203 = vld [vmem:[%s201] sm:$0xff]
                %204 = vst [vmem:[%s202] sm:$0xff] %v203
                %v205 = vld [vmem:[%s201 + $0x8] sm:$0xff]
                %206 = vst [vmem:[%s202 + $0x8] sm:$0xff] %v205
                %v207 = vld [vmem:[%s201 + $0x20] sm:$0xff]
                %208 = vst [vmem:[%s202 + $0x10] sm:$0xff] %v207
                %v209 = vld [vmem:[%s201 + $0x28] sm:$0xff]
                %210 = vst [vmem:[%s202 + $0x18] sm:$0xff] %v209
              $region49: #{tpu_custom_call.1} parent=43 // loop_footer
                %s200 = sadd.s32 1, %s196
              $region50: #{tpu_custom_call.1} parent=43 // loop_footer_branch
                %195 = sbr.rel target = $region46
              $region51: #{tpu_custom_call.1} parent=43 // loop_exit
                _
            $region44: #{tpu_custom_call.1} parent=39 // pred_fallthru
              _
            // Predicated region
            $region52: #{tpu_custom_call.1} parent=39 // pred_check
              _
            $region53: #{tpu_custom_call.1} parent=39 // pred_check_branch
              %212 = sbr.rel target = $region55
            $region54: #{tpu_custom_call.1} parent=39 // pred_region
              _
            $region55: #{tpu_custom_call.1} parent=39 // pred_fallthru
              _
          $region40: #{tpu_custom_call.1} parent=35 // pred_fallthru
            _
          %213 = vnop
        $region36: #{tpu_custom_call.1} parent=31 // pred_fallthru
          _
      $region32: #{tpu_custom_call.1} parent=5 // pred_fallthru
        _
      %p214 = scmp.le.s32.totalorder 1, %s14
      %p215 = scmp.lt.s32.totalorder %s14, 3
      %p216 = pnand %p214, %p215
      %p217 = pneg %p216
      // Predicated region
      $region56: #{tpu_custom_call.1} parent=5 // pred_check
        _
      $region57: #{tpu_custom_call.1} parent=5 // pred_check_branch
        %219 = sbr.rel (%p216) target = $region59
      $region58: #{tpu_custom_call.1} parent=5 // pred_region
        %s220 = ssub.s32 %s14, 1
        %s221 = sand.u32 %s27, 1
        %s222 = sand.u32 %s27, 1
        %s223 = smul.addr %s222, 32
        %s224 = scalar_lea.vmem [#allocation2], %s223
        // Predicated region
        $region60: #{tpu_custom_call.1} parent=58 // pred_check
          %p225 = pneg %p40
        $region61: #{tpu_custom_call.1} parent=58 // pred_check_branch
          %227 = sbr.rel (%p225) target = $region63
        $region62: #{tpu_custom_call.1} parent=58 // pred_region
          _
        $region63: #{tpu_custom_call.1} parent=58 // pred_fallthru
          _
        %s228 = sand.u32 %s27, 1
        %s229 = sand.u32 %s27, 1
        %s230 = smul.addr %s229, 32
        %s231 = scalar_lea.vmem [#allocation2], %s230
        %p232 = pneg %p40
        %p233 = pneg %p37
        %p234 = pneg %p61
        %p235 = pneg %p58
        %p236 = pneg %p82
        %p237 = pneg %p79
        %p238 = pneg %p103
        %p239 = pneg %p100
        %p240 = pneg %p124
        %p241 = pneg %p121
        %p242 = pneg %p150
        %p243 = pneg %p147
        %s244 = sand.u32 %s137, 1
        %s245 = scalar_lea.sflag [#allocation4], %s244
        %s246 = sand.u32 %s137, 1
        %s247 = smul.addr %s246, 8
        %s248 = scalar_lea.vmem [#allocation3], %s247
        %s249 = smul.u32 4, %s19
        %s250 = smul.u32 4, %s19
        %v252 = vld [vmem:[%s1] sm:$0xf]
        %v253 = vld [vmem:[%s1 + $0x4] sm:$0xf]
        %v254 = vld [vmem:[%s1 + $0x8] sm:$0xf]
        %v255 = vld [vmem:[%s1 + $0xc] sm:$0xf]
        %v256 = vld [vmem:[%s1 + $0x10] sm:$0xf]
        %v257 = vld [vmem:[%s1 + $0x14] sm:$0xf]
        %v258 = vld [vmem:[%s1 + $0x18] sm:$0xf]
        %v259 = vld [vmem:[%s1 + $0x1c] sm:$0xf]
        %v260 = vld [vmem:[%s3] sm:$0x1]
        %v261 = vld [vmem:[%s2] sm:$0xff]
        %v262 = vld [vmem:[%s2 + $0x8] sm:$0xff]
        %v263 = vld [vmem:[%s2 + $0x10] sm:$0xff]
        %v264 = vld [vmem:[%s2 + $0x18] sm:$0xff]
        %v265 = vld [vmem:[%s2 + $0x20] sm:$0xff]
        %v266 = vld [vmem:[%s2 + $0x28] sm:$0xff]
        %v267 = vld [vmem:[%s2 + $0x30] sm:$0xff]
        %v268 = vld [vmem:[%s2 + $0x38] sm:$0xff]
        %270 = vset.pattern.permute.xlu0 0
        %271 = vperm.xlu0 %270, %v261
        %v272 = vpop.permute.xlu0 %271
        %275 = vset.pattern.permute.xlu0 0
        %276 = vperm.xlu0 %275, %v262
        %v277 = vpop.permute.xlu0 %276
        %280 = vset.pattern.permute.xlu0 0
        %281 = vperm.xlu0 %280, %v263
        %v282 = vpop.permute.xlu0 %281
        %285 = vset.pattern.permute.xlu0 0
        %286 = vperm.xlu0 %285, %v264
        %v287 = vpop.permute.xlu0 %286
        %290 = vset.pattern.permute.xlu0 0
        %291 = vperm.xlu0 %290, %v265
        %v292 = vpop.permute.xlu0 %291
        %295 = vset.pattern.permute.xlu0 0
        %296 = vperm.xlu0 %295, %v266
        %v297 = vpop.permute.xlu0 %296
        %300 = vset.pattern.permute.xlu0 0
        %301 = vperm.xlu0 %300, %v267
        %v302 = vpop.permute.xlu0 %301
        %305 = vset.pattern.permute.xlu0 0
        %306 = vperm.xlu0 %305, %v268
        %v307 = vpop.permute.xlu0 %306
        %v309 = vld [vmem:[%s4] sm:$0x3]
        %311 = vset.pattern.permute.xlu0 0
        %312 = vperm.xlu0 %311, %v309
        %v313 = vpop.permute.xlu0 %312
        %v315 = vld [vmem:[%s224] sm:$0xff]
        %v316 = vld [vmem:[%s224 + $0x8] sm:$0xff]
        %v317 = vld [vmem:[%s224 + $0x10] sm:$0x11]
        %v318 = vld [vmem:[%s224 + $0x18] sm:$0x11]
        %v327 = vunpack.c.l.b16 %v252
        %v328 = vunpack.c.l.b16 %v253
        %v329 = vunpack.c.l.b16 %v254
        %v330 = vunpack.c.l.b16 %v255
        %v331 = vunpack.c.l.b16 %v256
        %v332 = vunpack.c.l.b16 %v257
        %v333 = vunpack.c.l.b16 %v258
        %v334 = vunpack.c.l.b16 %v259
        %v335 = vpack.c.b16 %v328, %v327
        %v336 = vpack.c.b16 %v330, %v329
        %v337 = vpack.c.b16 %v332, %v331
        %v338 = vpack.c.b16 %v334, %v333
        %v343 = vunpack.c.l.b16 %v315
        %v344 = vunpack.c.h.b16 %v315
        %v345 = vunpack.c.l.b16 %v316
        %v346 = vunpack.c.h.b16 %v316
        %v347 = vunpack.c.l.b16 %v317
        %v348 = vunpack.c.h.b16 %v317
        %v349 = vunpack.c.l.b16 %v318
        %v350 = vunpack.c.h.b16 %v318
        %v351 = vpack.c.b16 %v347, %v343
        %v352 = vpack.c.b16 %v348, %v344
        %v353 = vpack.c.b16 %v349, %v345
        %v354 = vpack.c.b16 %v350, %v346
        %vm355 = vcmask 80896
        %v357 = vsel %vm355, %v335, 0
        %v360 = vsel %vm355, %v336, 0
        %v363 = vsel %vm355, %v337, 0
        %v366 = vsel %vm355, %v338, 0
        %vm368 = vcmask 1044480
        %v370 = vsel %vm368, %v351, 0
        %v373 = vsel %vm368, %v352, 0
        %v376 = vsel %vm368, %v353, 0
        %v379 = vsel %vm368, %v354, 0
        %381 = vmatprep.subr.bf16.mxu0 %v373
        %382 = vmatpush1.bf16.msra.mxu0 %v370
        %383 = vmatprep.subr.bf16.mxu0 0
        %384 = vmatpush1.bf16.msra.mxu0 0
        %385 = vmatprep.subr.bf16.mxu0 0
        %386 = vmatpush1.bf16.msra.mxu0 0
        %387 = vmatprep.subr.bf16.mxu0 0
        %388 = vmatpush1.bf16.msra.mxu0 0
        %389 = vmatprep.subr.bf16.mxu0 0
        %390 = vmatpush1.bf16.msra.mxu0 0
        %391 = vmatprep.subr.bf16.mxu0 0
        %392 = vmatpush1.bf16.msra.mxu0 0
        %393 = vmatprep.subr.bf16.mxu0 0
        %394 = vmatpush1.bf16.msra.mxu0 0
        %395 = vmatprep.subr.bf16.mxu0 0
        %396 = vmatpush1.bf16.msra.mxu0 0
        %397 = vmatprep.subr.bf16.mxu0 0
        %398 = vmatpush1.bf16.msra.mxu0 0
        %399 = vmatprep.subr.bf16.mxu0 0
        %400 = vmatpush1.bf16.msra.mxu0 0
        %401 = vmatprep.subr.bf16.mxu0 0
        %402 = vmatpush1.bf16.msra.mxu0 0
        %403 = vmatprep.subr.bf16.mxu0 0
        %404 = vmatpush1.bf16.msra.mxu0 0
        %405 = vmatprep.subr.bf16.mxu0 0
        %406 = vmatpush1.bf16.msra.mxu0 0
        %407 = vmatprep.subr.bf16.mxu0 0
        %408 = vmatpush1.bf16.msra.mxu0 0
        %409 = vmatprep.subr.bf16.mxu0 0
        %410 = vmatpush1.bf16.msra.mxu0 0
        %411 = vmatprep.subr.bf16.mxu0 0
        %412 = vmatpush1.bf16.msra.mxu0 0
        %413 = vmatprep.mubr.bf16.mxu0 0
        %414 = vmatmul.mubr.bf16.gmra.mrb[0].mxu0 %v357
        %v415 = vpop.f32.mrb[0].mxu0
        %v416 = vadd.f32 %v272, %v415
        %v417 = vpop.f32.mrb[0].mxu0
        %v418 = vadd.f32 %v272, %v417
        %v419 = vpop.f32.mrb[0].mxu0
        %v420 = vadd.f32 %v277, %v419
        %v421 = vpop.f32.mrb[0].mxu0
        %v422 = vadd.f32 %v277, %v421
        %423 = vmatprep.mubr.bf16.mxu0 0
        %424 = vmatmul.mubr.bf16.gmra.mrb[0].mxu0 %v360
        %v425 = vpop.f32.mrb[0].mxu0
        %v426 = vadd.f32 %v282, %v425
        %v427 = vpop.f32.mrb[0].mxu0
        %v428 = vadd.f32 %v282, %v427
        %v429 = vpop.f32.mrb[0].mxu0
        %v430 = vadd.f32 %v287, %v429
        %v431 = vpop.f32.mrb[0].mxu0
        %v432 = vadd.f32 %v287, %v431
        %433 = vmatprep.mubr.bf16.mxu0 0
        %434 = vmatmul.mubr.bf16.gmra.mrb[0].mxu0 %v363
        %v435 = vpop.f32.mrb[0].mxu0
        %v436 = vadd.f32 %v292, %v435
        %v437 = vpop.f32.mrb[0].mxu0
        %v438 = vadd.f32 %v292, %v437
        %v439 = vpop.f32.mrb[0].mxu0
        %v440 = vadd.f32 %v297, %v439
        %v441 = vpop.f32.mrb[0].mxu0
        %v442 = vadd.f32 %v297, %v441
        %443 = vmatprep.mubr.bf16.mxu0 0
        %444 = vmatmul.mubr.bf16.gmra.mrb[0].mxu0 %v366
        %v445 = vpop.f32.mrb[0].mxu0
        %v446 = vadd.f32 %v302, %v445
        %v447 = vpop.f32.mrb[0].mxu0
        %v448 = vadd.f32 %v302, %v447
        %v449 = vpop.f32.mrb[0].mxu0
        %v450 = vadd.f32 %v307, %v449
        %v451 = vpop.f32.mrb[0].mxu0
        %v452 = vadd.f32 %v307, %v451
        %453 = vdwg.mxu0
        %454 = vmatprep.subr.bf16.mxu0 %v379
        %455 = vmatpush1.bf16.msra.mxu0 %v376
        %456 = vmatprep.subr.bf16.mxu0 0
        %457 = vmatpush1.bf16.msra.mxu0 0
        %458 = vmatprep.subr.bf16.mxu0 0
        %459 = vmatpush1.bf16.msra.mxu0 0
        %460 = vmatprep.subr.bf16.mxu0 0
        %461 = vmatpush1.bf16.msra.mxu0 0
        %462 = vmatprep.subr.bf16.mxu0 0
        %463 = vmatpush1.bf16.msra.mxu0 0
        %464 = vmatprep.subr.bf16.mxu0 0
        %465 = vmatpush1.bf16.msra.mxu0 0
        %466 = vmatprep.subr.bf16.mxu0 0
        %467 = vmatpush1.bf16.msra.mxu0 0
        %468 = vmatprep.subr.bf16.mxu0 0
        %469 = vmatpush1.bf16.msra.mxu0 0
        %470 = vmatprep.subr.bf16.mxu0 0
        %471 = vmatpush1.bf16.msra.mxu0 0
        %472 = vmatprep.subr.bf16.mxu0 0
        %473 = vmatpush1.bf16.msra.mxu0 0
        %474 = vmatprep.subr.bf16.mxu0 0
        %475 = vmatpush1.bf16.msra.mxu0 0
        %476 = vmatprep.subr.bf16.mxu0 0
        %477 = vmatpush1.bf16.msra.mxu0 0
        %478 = vmatprep.subr.bf16.mxu0 0
        %479 = vmatpush1.bf16.msra.mxu0 0
        %480 = vmatprep.subr.bf16.mxu0 0
        %481 = vmatpush1.bf16.msra.mxu0 0
        %482 = vmatprep.subr.bf16.mxu0 0
        %483 = vmatpush1.bf16.msra.mxu0 0
        %484 = vmatprep.subr.bf16.mxu0 0
        %485 = vmatpush1.bf16.msra.mxu0 0
        %486 = vmatprep.mubr.bf16.mxu0 0
        %487 = vmatmul.mubr.bf16.gmra.mrb[0].mxu0 %v357
        %v488 = vpop.f32.mrb[0].mxu0
        %v489 = vadd.f32 %v272, %v488
        %v490 = vpop.f32.mrb[0].mxu0
        %v491 = vadd.f32 %v272, %v490
        %v492 = vpop.f32.mrb[0].mxu0
        %v493 = vadd.f32 %v277, %v492
        %v494 = vpop.f32.mrb[0].mxu0
        %v495 = vadd.f32 %v277, %v494
        %496 = vmatprep.mubr.bf16.mxu0 0
        %497 = vmatmul.mubr.bf16.gmra.mrb[0].mxu0 %v360
        %v498 = vpop.f32.mrb[0].mxu0
        %v499 = vadd.f32 %v282, %v498
        %v500 = vpop.f32.mrb[0].mxu0
        %v501 = vadd.f32 %v282, %v500
        %v502 = vpop.f32.mrb[0].mxu0
        %v503 = vadd.f32 %v287, %v502
        %v504 = vpop.f32.mrb[0].mxu0
        %v505 = vadd.f32 %v287, %v504
        %506 = vmatprep.mubr.bf16.mxu0 0
        %507 = vmatmul.mubr.bf16.gmra.mrb[0].mxu0 %v363
        %v508 = vpop.f32.mrb[0].mxu0
        %v509 = vadd.f32 %v292, %v508
        %v510 = vpop.f32.mrb[0].mxu0
        %v511 = vadd.f32 %v292, %v510
        %v512 = vpop.f32.mrb[0].mxu0
        %v513 = vadd.f32 %v297, %v512
        %v514 = vpop.f32.mrb[0].mxu0
        %v515 = vadd.f32 %v297, %v514
        %516 = vmatprep.mubr.bf16.mxu0 0
        %517 = vmatmul.mubr.bf16.gmra.mrb[0].mxu0 %v366
        %v518 = vpop.f32.mrb[0].mxu0
        %v519 = vadd.f32 %v302, %v518
        %v520 = vpop.f32.mrb[0].mxu0
        %v521 = vadd.f32 %v302, %v520
        %v522 = vpop.f32.mrb[0].mxu0
        %v523 = vadd.f32 %v307, %v522
        %v524 = vpop.f32.mrb[0].mxu0
        %v525 = vadd.f32 %v307, %v524
        %526 = vdwg.mxu0
        %v527 = vmax.f32 %v416, 0.0
        %v528 = vmax.f32 %v418, 0.0
        %v529 = vmax.f32 %v489, 0.0
        %v530 = vmax.f32 %v491, 0.0
        %v531 = vmax.f32 %v420, 0.0
        %v532 = vmax.f32 %v422, 0.0
        %v533 = vmax.f32 %v493, 0.0
        %v534 = vmax.f32 %v495, 0.0
        %v535 = vmax.f32 %v426, 0.0
        %v536 = vmax.f32 %v428, 0.0
        %v537 = vmax.f32 %v499, 0.0
        %v538 = vmax.f32 %v501, 0.0
        %v539 = vmax.f32 %v430, 0.0
        %v540 = vmax.f32 %v432, 0.0
        %v541 = vmax.f32 %v503, 0.0
        %v542 = vmax.f32 %v505, 0.0
        %v543 = vmax.f32 %v436, 0.0
        %v544 = vmax.f32 %v438, 0.0
        %v545 = vmax.f32 %v509, 0.0
        %v546 = vmax.f32 %v511, 0.0
        %v547 = vmax.f32 %v440, 0.0
        %v548 = vmax.f32 %v442, 0.0
        %v549 = vmax.f32 %v513, 0.0
        %v550 = vmax.f32 %v515, 0.0
        %v551 = vmax.f32 %v446, 0.0
        %v552 = vmax.f32 %v448, 0.0
        %v553 = vmax.f32 %v519, 0.0
        %v554 = vmax.f32 %v521, 0.0
        %v555 = vmax.f32 %v450, 0.0
        %v556 = vmax.f32 %v452, 0.0
        %v557 = vmax.f32 %v523, 0.0
        %v558 = vmax.f32 %v525, 0.0
        %v559 = vpack.c.bf16 %v531, %v527
        %v560 = vpack.c.bf16 %v532, %v528
        %v561 = vpack.c.bf16 %v533, %v529
        %v562 = vpack.c.bf16 %v534, %v530
        %v563 = vpack.c.bf16 %v539, %v535
        %v564 = vpack.c.bf16 %v540, %v536
        %v565 = vpack.c.bf16 %v541, %v537
        %v566 = vpack.c.bf16 %v542, %v538
        %v567 = vpack.c.bf16 %v547, %v543
        %v568 = vpack.c.bf16 %v548, %v544
        %v569 = vpack.c.bf16 %v549, %v545
        %v570 = vpack.c.bf16 %v550, %v546
        %v571 = vpack.c.bf16 %v555, %v551
        %v572 = vpack.c.bf16 %v556, %v552
        %v573 = vpack.c.bf16 %v557, %v553
        %v574 = vpack.c.bf16 %v558, %v554
        %vm575 = vcmask 523264
        %v577 = vsel %vm575, %v260, 0
        %579 = vmatprep.subr.bf16.mxu0 %v560
        %580 = vmatpush1.bf16.msra.mxu0 %v559
        %581 = vmatprep.subr.bf16.mxu0 %v564
        %582 = vmatpush1.bf16.msra.mxu0 %v563
        %583 = vmatprep.subr.bf16.mxu0 %v568
        %584 = vmatpush1.bf16.msra.mxu0 %v567
        %585 = vmatprep.subr.bf16.mxu0 %v572
        %586 = vmatpush1.bf16.msra.mxu0 %v571
        %587 = vmatprep.subr.bf16.mxu0 0
        %588 = vmatpush1.bf16.msra.mxu0 0
        %589 = vmatprep.subr.bf16.mxu0 0
        %590 = vmatpush1.bf16.msra.mxu0 0
        %591 = vmatprep.subr.bf16.mxu0 0
        %592 = vmatpush1.bf16.msra.mxu0 0
        %593 = vmatprep.subr.bf16.mxu0 0
        %594 = vmatpush1.bf16.msra.mxu0 0
        %595 = vmatprep.subr.bf16.mxu0 0
        %596 = vmatpush1.bf16.msra.mxu0 0
        %597 = vmatprep.subr.bf16.mxu0 0
        %598 = vmatpush1.bf16.msra.mxu0 0
        %599 = vmatprep.subr.bf16.mxu0 0
        %600 = vmatpush1.bf16.msra.mxu0 0
        %601 = vmatprep.subr.bf16.mxu0 0
        %602 = vmatpush1.bf16.msra.mxu0 0
        %603 = vmatprep.subr.bf16.mxu0 0
        %604 = vmatpush1.bf16.msra.mxu0 0
        %605 = vmatprep.subr.bf16.mxu0 0
        %606 = vmatpush1.bf16.msra.mxu0 0
        %607 = vmatprep.subr.bf16.mxu0 0
        %608 = vmatpush1.bf16.msra.mxu0 0
        %609 = vmatprep.subr.bf16.mxu0 0
        %610 = vmatpush1.bf16.msra.mxu0 0
        %611 = vmatprep.mubr.bf16.mxu0 0
        %612 = vmatmul.mubr.bf16.gmra.mrb[0].mxu0 %v577
        %v613 = vpop.f32.mrb[0].mxu0
        %v614 = vadd.f32 %v313, %v613
        %v615 = vpop.f32.mrb[0].mxu0
        %v616 = vadd.f32 %v313, %v615
        %v617 = vpop.f32.mrb[0].mxu0
        %v618 = vpop.f32.mrb[0].mxu0
        %619 = vdwg.mxu0
        %620 = vmatprep.subr.bf16.mxu0 %v562
        %621 = vmatpush1.bf16.msra.mxu0 %v561
        %622 = vmatprep.subr.bf16.mxu0 %v566
        %623 = vmatpush1.bf16.msra.mxu0 %v565
        %624 = vmatprep.subr.bf16.mxu0 %v570
        %625 = vmatpush1.bf16.msra.mxu0 %v569
        %626 = vmatprep.subr.bf16.mxu0 %v574
        %627 = vmatpush1.bf16.msra.mxu0 %v573
        %628 = vmatprep.subr.bf16.mxu0 0
        %629 = vmatpush1.bf16.msra.mxu0 0
        %630 = vmatprep.subr.bf16.mxu0 0
        %631 = vmatpush1.bf16.msra.mxu0 0
        %632 = vmatprep.subr.bf16.mxu0 0
        %633 = vmatpush1.bf16.msra.mxu0 0
        %634 = vmatprep.subr.bf16.mxu0 0
        %635 = vmatpush1.bf16.msra.mxu0 0
        %636 = vmatprep.subr.bf16.mxu0 0
        %637 = vmatpush1.bf16.msra.mxu0 0
        %638 = vmatprep.subr.bf16.mxu0 0
        %639 = vmatpush1.bf16.msra.mxu0 0
        %640 = vmatprep.subr.bf16.mxu0 0
        %641 = vmatpush1.bf16.msra.mxu0 0
        %642 = vmatprep.subr.bf16.mxu0 0
        %643 = vmatpush1.bf16.msra.mxu0 0
        %644 = vmatprep.subr.bf16.mxu0 0
        %645 = vmatpush1.bf16.msra.mxu0 0
        %646 = vmatprep.subr.bf16.mxu0 0
        %647 = vmatpush1.bf16.msra.mxu0 0
        %648 = vmatprep.subr.bf16.mxu0 0
        %649 = vmatpush1.bf16.msra.mxu0 0
        %650 = vmatprep.subr.bf16.mxu0 0
        %651 = vmatpush1.bf16.msra.mxu0 0
        %652 = vmatprep.mubr.bf16.mxu0 0
        %653 = vmatmul.mubr.bf16.gmra.mrb[0].mxu0 %v577
        %v654 = vpop.f32.mrb[0].mxu0
        %v655 = vadd.f32 %v313, %v654
        %v656 = vpop.f32.mrb[0].mxu0
        %v657 = vadd.f32 %v313, %v656
        %v658 = vpop.f32.mrb[0].mxu0
        %v659 = vpop.f32.mrb[0].mxu0
        %660 = vdwg.mxu0
        %v665 = vcombine.low %v614, %v616
        %v666 = vcombine.low %v655, %v657
        %v668 = vunpack.c.l.s4 1983009808
        %v669 = vunpack.c.0.s8 %v668
        %v670 = vlaneseq
        %v671 = vshrl.u32 %v670, 7
        %v672 = vsub.s32 %v669, %v671
        %v673 = vrot.slane %v665, %v672
        %v675 = vunpack.c.l.s4 1983009808
        %v676 = vunpack.c.0.s8 %v675
        %v677 = vlaneseq
        %v678 = vshrl.u32 %v677, 7
        %v679 = vsub.s32 %v676, %v678
        %v680 = vrot.slane %v666, %v679
        %v681 = vcombine.low %v673, %v680
        %683 = vst [vmem:[%s248] sm:$0xff] %v681
        %s684 = sand.u32 %s137, 1
        %s685 = scalar_lea.sflag [#allocation4], %s684
        %s686 = sand.u32 %s137, 1
        %s687 = smul.addr %s686, 8
        %s688 = scalar_lea.vmem [#allocation3], %s687
        // Predicated region
        $region64: #{tpu_custom_call.1} parent=58 // pred_check
          %p689 = pneg %p147
        $region65: #{tpu_custom_call.1} parent=58 // pred_check_branch
          %691 = sbr.rel (%p689) target = $region67
        $region66: #{tpu_custom_call.1} parent=58 // pred_region
          %s692 = smul.u32 4, %s19
          %s694 = ssub.s32 128, 128
          %695 = vsyncadd %s685, %s694
          %s696 = smul.addr %s692, 32
          %s697 = scalar_lea.hbm %s5, %s696
          %s699 = sshll.u32 %s688, 4
          %s700 = int_to_ptr.vmem [resolvable:$true] %s699
          %702 = dma.vmem_to_hbm [thread:$0]  %s700, 128, %s697, %s685
        $region67: #{tpu_custom_call.1} parent=58 // pred_fallthru
          _
      $region59: #{tpu_custom_call.1} parent=5 // pred_fallthru
        _
      %p703 = scmp.le.s32.totalorder 2, %s14
      // Predicated region
      $region68: #{tpu_custom_call.1} parent=5 // pred_check
        %p704 = pneg %p703
      $region69: #{tpu_custom_call.1} parent=5 // pred_check_branch
        %706 = sbr.rel (%p704) target = $region71
      $region70: #{tpu_custom_call.1} parent=5 // pred_region
        %s707 = ssub.s32 %s14, 2
        // Predicated region
        $region72: #{tpu_custom_call.1} parent=70 // pred_check
          %p708 = pneg %p153
        $region73: #{tpu_custom_call.1} parent=70 // pred_check_branch
          %710 = sbr.rel (%p708) target = $region75
        $region74: #{tpu_custom_call.1} parent=70 // pred_region
          %s711 = sand.u32 %s138, 1
          %s712 = scalar_lea.sflag [#allocation4], %s711
          %s713 = sand.u32 %s138, 1
          %s714 = smul.addr %s713, 8
          %s715 = scalar_lea.vmem [#allocation3], %s714
          %716 = dma.done %s712, 128
        $region75: #{tpu_custom_call.1} parent=70 // pred_fallthru
          _
      $region71: #{tpu_custom_call.1} parent=5 // pred_fallthru
        _
    $region6: #{tpu_custom_call.1} parent=1 // loop_footer
      %s18 = sadd.s32 1, %s14
    $region7: #{tpu_custom_call.1} parent=1 // loop_footer_branch
      %13 = sbr.rel target = $region3
    $region8: #{tpu_custom_call.1} parent=1 // loop_exit
      _
    %717 = vsyncpa [#allocation4], 1
    %s718 = scalar_lea.sflag [#allocation4], 1
    %719 = vsyncpa %s718, 1

</llo_original>
